<compile_context>
chip_gen: v5e
topology: v5e:2x2
jax: 0.10.0
libtpu: 0.0.40
codegen_flags: <defaults>
</compile_context>

<pallas_src>
import math
import functools

import jax
import jax.numpy as jnp
from jax.experimental import pallas as pl
from jax.experimental.pallas import tpu as pltpu


_LANE = 128
_SUBLANE = {
    jnp.dtype(jnp.float32): 8,
    jnp.dtype(jnp.bfloat16): 16,
    jnp.dtype(jnp.float16): 16,
    jnp.dtype(jnp.int8): 32,
}


def _round_up(x, m):
    return ((x + m - 1) // m) * m


def _pick_tile(dim, default, align):
    """Largest align-multiple tile <= default, or the full (align-padded) dim."""
    default = _round_up(default, align)
    padded = _round_up(dim, align)
    return min(default, padded)


def _linear_kernel_inplace(x_ref, w_ref, b_ref, o_ref):
    """f32 output: accumulate straight into the resident output block."""
    k = pl.program_id(2)

    @pl.when(k == 0)
    def _():
        # bias folded into the accumulator init (replaces zeros + epilogue add)
        o_ref[...] = jnp.broadcast_to(b_ref[...].astype(o_ref.dtype), o_ref.shape)

    o_ref[...] += jnp.dot(
        x_ref[...], w_ref[...], preferred_element_type=jnp.float32
    )


def _linear_kernel_acc(x_ref, w_ref, b_ref, o_ref, acc_ref):
    """Narrow output dtype (e.g. bf16): f32 VMEM accumulator, cast on last k."""
    k = pl.program_id(2)

    @pl.when(k == 0)
    def _():
        acc_ref[...] = jnp.broadcast_to(
            b_ref[...].astype(jnp.float32), acc_ref.shape
        )

    acc_ref[...] += jnp.dot(
        x_ref[...], w_ref[...], preferred_element_type=jnp.float32
    )

    @pl.when(k == pl.num_programs(2) - 1)
    def _():
        o_ref[...] = acc_ref[...].astype(o_ref.dtype)


@functools.partial(jax.jit, static_argnames=("tm", "tn", "tk"))
def my_linear(x, w, b, *, tm=512, tn=512, tk=1024):
    """y = x @ w + b, tiled Pallas matmul (x: (M, in), w: (in, out), b: (out,))."""
    M, K_in = x.shape
    K_in2, N_out = w.shape
    assert K_in == K_in2, "x / w inner dims must match"
    out_dtype = x.dtype

    sub = _SUBLANE.get(jnp.dtype(out_dtype), 8)
    tm_e = _pick_tile(M, tm, sub)        # second-to-last dims: sublane-aligned
    tn_e = _pick_tile(N_out, tn, _LANE)  # lane dims: 128-aligned
    tk_e = _pick_tile(K_in, tk, _LANE)

    Mp = _round_up(M, tm_e)
    Np = _round_up(N_out, tn_e)
    Kp = _round_up(K_in, tk_e)

    # Pad to tile multiples (zeros contribute nothing to the reduction).
    if (Mp, Kp) != (M, K_in):
        x = jnp.pad(x, ((0, Mp - M), (0, Kp - K_in)))
    if (Kp, Np) != (K_in, N_out):
        w = jnp.pad(w, ((0, Kp - K_in), (0, Np - N_out)))
    b2d = b.reshape(1, N_out)
    if Np != N_out:
        b2d = jnp.pad(b2d, ((0, 0), (0, Np - N_out)))

    grid = (Mp // tm_e, Np // tn_e, Kp // tk_e)

    direct = jnp.dtype(out_dtype) == jnp.dtype(jnp.float32)
    kernel = _linear_kernel_inplace if direct else _linear_kernel_acc
    scratch = [] if direct else [pltpu.VMEM((tm_e, tn_e), jnp.float32)]

    y = pl.pallas_call(
        kernel,
        out_shape=jax.ShapeDtypeStruct((Mp, Np), out_dtype),
        grid_spec=pltpu.PrefetchScalarGridSpec(
            num_scalar_prefetch=0,
            grid=grid,
            in_specs=[
                pl.BlockSpec((tm_e, tk_e), lambda i, j, k: (i, k)),  # x tile
                pl.BlockSpec((tk_e, tn_e), lambda i, j, k: (k, j)),  # w tile
                pl.BlockSpec((1, tn_e), lambda i, j, k: (0, j)),     # bias (k-invariant)
            ],
            out_specs=pl.BlockSpec((tm_e, tn_e), lambda i, j, k: (i, j)),
            scratch_shapes=scratch,
        ),
        compiler_params=pltpu.CompilerParams(
            dimension_semantics=("parallel", "parallel", "arbitrary"),
            vmem_limit_bytes=48 * 1024 * 1024,  # fits v7x's 64 MiB physical VMEM
        ),
    )(x, w, b2d)

    if (Mp, Np) != (M, N_out):
        y = y[:M, :N_out]
    return y


def init_params(key, in_features, out_features, dtype=jnp.float32):
    """Mirror of the module's reset_parameters().

    PyTorch: kaiming_uniform_(weight, a=sqrt(5)) on the (in, out) tensor
    -> fan_in = weight.size(1) = out_features; bias ~ U(-1/sqrt(fan_in), ...).
    """
    kw, kb = jax.random.split(key)
    fan_in = out_features
    gain = math.sqrt(2.0 / (1.0 + 5.0))          # a = sqrt(5)
    w_bound = gain * math.sqrt(3.0 / fan_in)
    b_bound = 1.0 / math.sqrt(fan_in)
    w = jax.random.uniform(
        kw, (in_features, out_features), dtype, minval=-w_bound, maxval=w_bound
    )
    b = jax.random.uniform(
        kb, (out_features,), dtype, minval=-b_bound, maxval=b_bound
    )
    return w, b


if __name__ == "__main__":
    key = jax.random.PRNGKey(0)

    # --- test 1: small, non-divisible shapes (exercises padding), f32 ---
    M, IN, OUT = 10, 200, 136
    k1, k2, key = jax.random.split(key, 3)
    x = jax.random.normal(k1, (M, IN), jnp.float32)
    w, b = init_params(k2, IN, OUT)
    y = my_linear(x, w, b)
    jax.block_until_ready(y)
    y_ref = x @ w + b
    assert y.shape == (M, OUT)
    assert jnp.allclose(y, y_ref, atol=2e-3, rtol=2e-3)

    # --- test 2: tile-aligned shapes, f32 (in-place accumulate path) ---
    M, IN, OUT = 256, 512, 384
    k1, k2, key = jax.random.split(key, 3)
    x = jax.random.normal(k1, (M, IN), jnp.float32)
    w, b = init_params(k2, IN, OUT)
    y = my_linear(x, w, b)
    jax.block_until_ready(y)
    y_ref = x @ w + b
    assert jnp.allclose(y, y_ref, atol=2e-3, rtol=2e-3)

    # --- test 3: bf16 inputs with f32 accumulation (scratch kernel path) ---
    M, IN, OUT = 128, 512, 256
    k1, k2, key = jax.random.split(key, 3)
    xb = jax.random.normal(k1, (M, IN), jnp.float32).astype(jnp.bfloat16)
    wf, bf = init_params(k2, IN, OUT)
    wb, bb = wf.astype(jnp.bfloat16), bf.astype(jnp.bfloat16)
    yb = my_linear(xb, wb, bb)
    jax.block_until_ready(yb)
    yb_ref = xb.astype(jnp.float32) @ wb.astype(jnp.float32) + bb.astype(jnp.float32)
    assert jnp.allclose(yb.astype(jnp.float32), yb_ref, atol=3e-2, rtol=3e-2)

    print("KERNEL_OK")
</pallas_src>

<mosaic_0001>
module attributes {stable_mosaic.version = 11 : i64} {
  func.func @_linear_kernel_inplace(%arg0: i32, %arg1: i32, %arg2: i32, %arg3: memref<16x256xf32, #tpu.memory_space<vmem>>, %arg4: memref<256x256xf32, #tpu.memory_space<vmem>>, %arg5: memref<1x256xf32, #tpu.memory_space<vmem>>, %arg6: memref<16x256xf32, #tpu.memory_space<vmem>>) attributes {dimension_semantics = [#tpu.dimension_semantics<parallel>, #tpu.dimension_semantics<parallel>, #tpu.dimension_semantics<arbitrary>], iteration_bounds = array<i64: 1, 1, 1>, scalar_prefetch = 0 : i64, scratch_operands = 0 : i64, tpu.core_type = #tpu.core_type<tc>, window_params = [{transform_indices = @transform_0, window_bounds = array<i64: 16, 256>}, {transform_indices = @transform_1, window_bounds = array<i64: 256, 256>}, {transform_indices = @transform_2, window_bounds = array<i64: 1, 256>}, {transform_indices = @transform_3, window_bounds = array<i64: 16, 256>}]} {
    %c0_i32 = arith.constant 0 : i32
    %0 = arith.cmpi eq, %arg2, %c0_i32 : i32
    %1 = arith.extui %0 : i1 to i32
    %c0_i32_0 = arith.constant 0 : i32
    %2 = arith.cmpi ne, %1, %c0_i32_0 : i32
    scf.if %2 {
      %c0_8 = arith.constant 0 : index
      %c0_9 = arith.constant 0 : index
      %9 = vector.load %arg5[%c0_8, %c0_9] : memref<1x256xf32, #tpu.memory_space<vmem>>, vector<1x256xf32>
      %10 = vector.shape_cast %9 : vector<1x256xf32> to vector<1x256xf32>
      %11 = vector.broadcast %10 : vector<1x256xf32> to vector<16x256xf32>
      %c0_10 = arith.constant 0 : index
      %c0_11 = arith.constant 0 : index
      %12 = vector.load %arg6[%c0_10, %c0_11] : memref<16x256xf32, #tpu.memory_space<vmem>>, vector<16x256xf32>
      tpu.vector_store %arg6[%c0_10, %c0_11], %11 {strides = array<i32>} : memref<16x256xf32, #tpu.memory_space<vmem>>, vector<16x256xf32>,
    } else {
    }
    %c0 = arith.constant 0 : index
    %c0_1 = arith.constant 0 : index
    %3 = vector.load %arg6[%c0, %c0_1] : memref<16x256xf32, #tpu.memory_space<vmem>>, vector<16x256xf32>
    %c0_2 = arith.constant 0 : index
    %c0_3 = arith.constant 0 : index
    %4 = vector.load %arg3[%c0_2, %c0_3] : memref<16x256xf32, #tpu.memory_space<vmem>>, vector<16x256xf32>
    %c0_4 = arith.constant 0 : index
    %c0_5 = arith.constant 0 : index
    %5 = vector.load %arg4[%c0_4, %c0_5] : memref<256x256xf32, #tpu.memory_space<vmem>>, vector<256x256xf32>
    %cst = arith.constant dense<0.000000e+00> : vector<16x256xf32>
    %6 = tpu.matmul %4, %5, %cst {dimension_numbers = #tpu.dot_dimension_numbers<[1], [0], [0], [1], [0, 0, 1, 1], [], []>} : vector<16x256xf32>, vector<256x256xf32>, vector<16x256xf32> -> vector<16x256xf32>
    %7 = arith.addf %3, %6 : vector<16x256xf32>
    %c0_6 = arith.constant 0 : index
    %c0_7 = arith.constant 0 : index
    %8 = vector.load %arg6[%c0_6, %c0_7] : memref<16x256xf32, #tpu.memory_space<vmem>>, vector<16x256xf32>
    tpu.vector_store %arg6[%c0_6, %c0_7], %7 {strides = array<i32>} : memref<16x256xf32, #tpu.memory_space<vmem>>, vector<16x256xf32>,
    return
  }
  func.func @transform_0(%arg0: i32, %arg1: i32, %arg2: i32) -> (i32, i32) {
    %c0_i32 = arith.constant 0 : i32
    return %arg0, %arg2 : i32, i32
  }
  func.func @transform_1(%arg0: i32, %arg1: i32, %arg2: i32) -> (i32, i32) {
    %c0_i32 = arith.constant 0 : i32
    return %arg2, %arg1 : i32, i32
  }
  func.func @transform_2(%arg0: i32, %arg1: i32, %arg2: i32) -> (i32, i32) {
    %c0_i32 = arith.constant 0 : i32
    %c0_i32_0 = arith.constant 0 : i32
    return %c0_i32, %arg1 : i32, i32
  }
  func.func @transform_3(%arg0: i32, %arg1: i32, %arg2: i32) -> (i32, i32) {
    %c0_i32 = arith.constant 0 : i32
    return %arg0, %arg1 : i32, i32
  }
}

</mosaic_0001>

<llo_original>
// kernel: my_linear.1
$region0: #{my_linear.1}
  #allocation0 [shape = 'u32[]', space=smem, size = 0x4, offset = 0x4, fixed_abs, tag = 'smem constant byte address 0x4 - core index']
  #allocation1 [shape = 'u32[72,128]{1,0:T(1,128)}', space=vmem, size = 0x9000, scoped, tag = 'internal scratch']
  %s0 = inlined_call_operand.vmem [shape: f32[16,256], index: 0, kind: input, shape index: {}]
  %s1 = inlined_call_operand.vmem [shape: f32[256,256], index: 1, kind: input, shape index: {}]
  %s2 = inlined_call_operand.vmem [shape: f32[1,256], index: 2, kind: input, shape index: {}]
  %s3 = inlined_call_operand.hbm [shape: f32[16,256], index: 3, kind: output, shape index: {}]
  %s4 = sld [smem:[#allocation0]]
  $region26: #{my_linear.1} parent=0
    _
  %s6 = ssub.s32 1, %s4
  %s7 = scalar_select 0, %s6, %s4
  $region1: #{my_linear.1} parent=0
    #allocation2 [shape = 'u8[16384]{0}', space=vmem, size = 0x4000, scoped, tag = 'output window, operand 0, single buffered']
    #allocation3 [shape = 's32[1]{0}', space=sflag, size = 0x4, scoped, tag = 'scoped memory for my_linear.1']
    %8 = vsyncpa [#allocation3], 0
    // Predicated region
    $region2: #{my_linear.1} parent=1 // pred_check
      _
    $region3: #{my_linear.1} parent=1 // pred_check_branch
      %10 = sbr.rel (0) target = $region5
    $region4: #{my_linear.1} parent=1 // pred_region
      _
    $region5: #{my_linear.1} parent=1 // pred_fallthru
      _
    // Predicated region
    $region6: #{my_linear.1} parent=1 // pred_check
      _
    $region7: #{my_linear.1} parent=1 // pred_check_branch
      %12 = sbr.rel (0) target = $region9
    $region8: #{my_linear.1} parent=1 // pred_region
      _
    $region9: #{my_linear.1} parent=1 // pred_fallthru
      _
    // Predicated region
    $region10: #{my_linear.1} parent=1 // pred_check
      _
    $region11: #{my_linear.1} parent=1 // pred_check_branch
      %14 = sbr.rel (0) target = $region13
    $region12: #{my_linear.1} parent=1 // pred_region
      _
    $region13: #{my_linear.1} parent=1 // pred_fallthru
      _
    %p15 = scmp.eq.s32.totalorder 0, 0
    // Predicated region
    $region14: #{my_linear.1} parent=1 // pred_check
      %p16 = pneg %p15
    $region15: #{my_linear.1} parent=1 // pred_check_branch
      %18 = sbr.rel (%p16) target = $region17
    $region16: #{my_linear.1} parent=1 // pred_region
      %v19 = vld [vmem:[%s2] sm:$0x3]
      %v21 = vperm.slane %v19, 0
      %v22 = vperm.slane %v19, 1
      %25 = vst [vmem:[#allocation2] sm:$0xff] %v21
      %26 = vst [vmem:[#allocation2 + $0x8] sm:$0xff] %v22
      %27 = vst [vmem:[#allocation2 + $0x10] sm:$0xff] %v21
      %28 = vst [vmem:[#allocation2 + $0x18] sm:$0xff] %v22
    $region17: #{my_linear.1} parent=1 // pred_fallthru
      _
    %v29 = vld [vmem:[#allocation2] sm:$0xff]
    %v30 = vld [vmem:[#allocation2 + $0x8] sm:$0xff]
    %v31 = vld [vmem:[#allocation2 + $0x10] sm:$0xff]
    %v32 = vld [vmem:[#allocation2 + $0x18] sm:$0xff]
    %v33 = vld [vmem:[%s0] sm:$0xff]
    %v34 = vld [vmem:[%s0 + $0x8] sm:$0xff]
    %v35 = vld [vmem:[%s0 + $0x10] sm:$0xff]
    %v36 = vld [vmem:[%s0 + $0x18] sm:$0xff]
    %v37 = vld [vmem:[%s1] sm:$0xff]
    %v38 = vld [vmem:[%s1 + $0x8] sm:$0xff]
    %v39 = vld [vmem:[%s1 + $0x10] sm:$0xff]
    %v40 = vld [vmem:[%s1 + $0x18] sm:$0xff]
    %v41 = vld [vmem:[%s1 + $0x20] sm:$0xff]
    %v42 = vld [vmem:[%s1 + $0x28] sm:$0xff]
    %v43 = vld [vmem:[%s1 + $0x30] sm:$0xff]
    %v44 = vld [vmem:[%s1 + $0x38] sm:$0xff]
    %v45 = vld [vmem:[%s1 + $0x40] sm:$0xff]
    %v46 = vld [vmem:[%s1 + $0x48] sm:$0xff]
    %v47 = vld [vmem:[%s1 + $0x50] sm:$0xff]
    %v48 = vld [vmem:[%s1 + $0x58] sm:$0xff]
    %v49 = vld [vmem:[%s1 + $0x60] sm:$0xff]
    %v50 = vld [vmem:[%s1 + $0x68] sm:$0xff]
    %v51 = vld [vmem:[%s1 + $0x70] sm:$0xff]
    %v52 = vld [vmem:[%s1 + $0x78] sm:$0xff]
    %v53 = vld [vmem:[%s1 + $0x80] sm:$0xff]
    %v54 = vld [vmem:[%s1 + $0x88] sm:$0xff]
    %v55 = vld [vmem:[%s1 + $0x90] sm:$0xff]
    %v56 = vld [vmem:[%s1 + $0x98] sm:$0xff]
    %v57 = vld [vmem:[%s1 + $0xa0] sm:$0xff]
    %v58 = vld [vmem:[%s1 + $0xa8] sm:$0xff]
    %v59 = vld [vmem:[%s1 + $0xb0] sm:$0xff]
    %v60 = vld [vmem:[%s1 + $0xb8] sm:$0xff]
    %v61 = vld [vmem:[%s1 + $0xc0] sm:$0xff]
    %v62 = vld [vmem:[%s1 + $0xc8] sm:$0xff]
    %v63 = vld [vmem:[%s1 + $0xd0] sm:$0xff]
    %v64 = vld [vmem:[%s1 + $0xd8] sm:$0xff]
    %v65 = vld [vmem:[%s1 + $0xe0] sm:$0xff]
    %v66 = vld [vmem:[%s1 + $0xe8] sm:$0xff]
    %v67 = vld [vmem:[%s1 + $0xf0] sm:$0xff]
    %v68 = vld [vmem:[%s1 + $0xf8] sm:$0xff]
    %v69 = vld [vmem:[%s1 + $0x100] sm:$0xff]
    %v70 = vld [vmem:[%s1 + $0x108] sm:$0xff]
    %v71 = vld [vmem:[%s1 + $0x110] sm:$0xff]
    %v72 = vld [vmem:[%s1 + $0x118] sm:$0xff]
    %v73 = vld [vmem:[%s1 + $0x120] sm:$0xff]
    %v74 = vld [vmem:[%s1 + $0x128] sm:$0xff]
    %v75 = vld [vmem:[%s1 + $0x130] sm:$0xff]
    %v76 = vld [vmem:[%s1 + $0x138] sm:$0xff]
    %v77 = vld [vmem:[%s1 + $0x140] sm:$0xff]
    %v78 = vld [vmem:[%s1 + $0x148] sm:$0xff]
    %v79 = vld [vmem:[%s1 + $0x150] sm:$0xff]
    %v80 = vld [vmem:[%s1 + $0x158] sm:$0xff]
    %v81 = vld [vmem:[%s1 + $0x160] sm:$0xff]
    %v82 = vld [vmem:[%s1 + $0x168] sm:$0xff]
    %v83 = vld [vmem:[%s1 + $0x170] sm:$0xff]
    %v84 = vld [vmem:[%s1 + $0x178] sm:$0xff]
    %v85 = vld [vmem:[%s1 + $0x180] sm:$0xff]
    %v86 = vld [vmem:[%s1 + $0x188] sm:$0xff]
    %v87 = vld [vmem:[%s1 + $0x190] sm:$0xff]
    %v88 = vld [vmem:[%s1 + $0x198] sm:$0xff]
    %v89 = vld [vmem:[%s1 + $0x1a0] sm:$0xff]
    %v90 = vld [vmem:[%s1 + $0x1a8] sm:$0xff]
    %v91 = vld [vmem:[%s1 + $0x1b0] sm:$0xff]
    %v92 = vld [vmem:[%s1 + $0x1b8] sm:$0xff]
    %v93 = vld [vmem:[%s1 + $0x1c0] sm:$0xff]
    %v94 = vld [vmem:[%s1 + $0x1c8] sm:$0xff]
    %v95 = vld [vmem:[%s1 + $0x1d0] sm:$0xff]
    %v96 = vld [vmem:[%s1 + $0x1d8] sm:$0xff]
    %v97 = vld [vmem:[%s1 + $0x1e0] sm:$0xff]
    %v98 = vld [vmem:[%s1 + $0x1e8] sm:$0xff]
    %v99 = vld [vmem:[%s1 + $0x1f0] sm:$0xff]
    %v100 = vld [vmem:[%s1 + $0x1f8] sm:$0xff]
    %101 = vmatpush.msra.mxu0 %v67
    %102 = vmatpush.msra.mxu0 %v65
    %103 = vmatpush.msra.mxu0 %v63
    %104 = vmatpush.msra.mxu0 %v61
    %105 = vmatpush.msra.mxu0 %v59
    %106 = vmatpush.msra.mxu0 %v57
    %107 = vmatpush.msra.mxu0 %v55
    %108 = vmatpush.msra.mxu0 %v53
    %109 = vmatpush.msra.mxu0 %v51
    %110 = vmatpush.msra.mxu0 %v49
    %111 = vmatpush.msra.mxu0 %v47
    %112 = vmatpush.msra.mxu0 %v45
    %113 = vmatpush.msra.mxu0 %v43
    %114 = vmatpush.msra.mxu0 %v41
    %115 = vmatpush.msra.mxu0 %v39
    %116 = vmatpush.msra.mxu0 %v37
    %117 = vmatmul.f32.gmra.mxu0 %v33
    %v118 = vpop.f32.mrf.mxu0
    %v119 = vadd.f32 0.0, %v118
    %120 = vmatmul.f32.gmra.mxu0 %v35
    %v121 = vpop.f32.mrf.mxu0
    %v122 = vadd.f32 0.0, %v121
    %123 = vdwg.mxu0
    %124 = vmatpush.msra.mxu0 %v99
    %125 = vmatpush.msra.mxu0 %v97
    %126 = vmatpush.msra.mxu0 %v95
    %127 = vmatpush.msra.mxu0 %v93
    %128 = vmatpush.msra.mxu0 %v91
    %129 = vmatpush.msra.mxu0 %v89
    %130 = vmatpush.msra.mxu0 %v87
    %131 = vmatpush.msra.mxu0 %v85
    %132 = vmatpush.msra.mxu0 %v83
    %133 = vmatpush.msra.mxu0 %v81
    %134 = vmatpush.msra.mxu0 %v79
    %135 = vmatpush.msra.mxu0 %v77
    %136 = vmatpush.msra.mxu0 %v75
    %137 = vmatpush.msra.mxu0 %v73
    %138 = vmatpush.msra.mxu0 %v71
    %139 = vmatpush.msra.mxu0 %v69
    %140 = vmatmul.f32.gmra.mxu0 %v34
    %v141 = vpop.f32.mrf.mxu0
    %v142 = vadd.f32 %v119, %v141
    %143 = vmatmul.f32.gmra.mxu0 %v36
    %v144 = vpop.f32.mrf.mxu0
    %v145 = vadd.f32 %v122, %v144
    %146 = vdwg.mxu0
    %147 = vmatpush.msra.mxu0 %v68
    %148 = vmatpush.msra.mxu0 %v66
    %149 = vmatpush.msra.mxu0 %v64
    %150 = vmatpush.msra.mxu0 %v62
    %151 = vmatpush.msra.mxu0 %v60
    %152 = vmatpush.msra.mxu0 %v58
    %153 = vmatpush.msra.mxu0 %v56
    %154 = vmatpush.msra.mxu0 %v54
    %155 = vmatpush.msra.mxu0 %v52
    %156 = vmatpush.msra.mxu0 %v50
    %157 = vmatpush.msra.mxu0 %v48
    %158 = vmatpush.msra.mxu0 %v46
    %159 = vmatpush.msra.mxu0 %v44
    %160 = vmatpush.msra.mxu0 %v42
    %161 = vmatpush.msra.mxu0 %v40
    %162 = vmatpush.msra.mxu0 %v38
    %163 = vmatmul.f32.gmra.mxu0 %v33
    %v164 = vpop.f32.mrf.mxu0
    %v165 = vadd.f32 0.0, %v164
    %166 = vmatmul.f32.gmra.mxu0 %v35
    %v167 = vpop.f32.mrf.mxu0
    %v168 = vadd.f32 0.0, %v167
    %169 = vdwg.mxu0
    %170 = vmatpush.msra.mxu0 %v100
    %171 = vmatpush.msra.mxu0 %v98
    %172 = vmatpush.msra.mxu0 %v96
    %173 = vmatpush.msra.mxu0 %v94
    %174 = vmatpush.msra.mxu0 %v92
    %175 = vmatpush.msra.mxu0 %v90
    %176 = vmatpush.msra.mxu0 %v88
    %177 = vmatpush.msra.mxu0 %v86
    %178 = vmatpush.msra.mxu0 %v84
    %179 = vmatpush.msra.mxu0 %v82
    %180 = vmatpush.msra.mxu0 %v80
    %181 = vmatpush.msra.mxu0 %v78
    %182 = vmatpush.msra.mxu0 %v76
    %183 = vmatpush.msra.mxu0 %v74
    %184 = vmatpush.msra.mxu0 %v72
    %185 = vmatpush.msra.mxu0 %v70
    %186 = vmatmul.f32.gmra.mxu0 %v34
    %v187 = vpop.f32.mrf.mxu0
    %v188 = vadd.f32 %v165, %v187
    %189 = vmatmul.f32.gmra.mxu0 %v36
    %v190 = vpop.f32.mrf.mxu0
    %v191 = vadd.f32 %v168, %v190
    %192 = vdwg.mxu0
    %v193 = vadd.f32 %v29, %v142
    %v194 = vadd.f32 %v30, %v188
    %v195 = vadd.f32 %v31, %v145
    %v196 = vadd.f32 %v32, %v191
    %197 = vst [vmem:[#allocation2] sm:$0xff] %v193
    %198 = vst [vmem:[#allocation2 + $0x8] sm:$0xff] %v194
    %199 = vst [vmem:[#allocation2 + $0x10] sm:$0xff] %v195
    %200 = vst [vmem:[#allocation2 + $0x18] sm:$0xff] %v196
    // Predicated region
    $region18: #{my_linear.1} parent=1 // pred_check
      _
    $region19: #{my_linear.1} parent=1 // pred_check_branch
      %202 = sbr.rel (0) target = $region21
    $region20: #{my_linear.1} parent=1 // pred_region
      %204 = vsyncadd [#allocation3], 0
      %s205 = sshll.u32 [#allocation2], 4
      %s206 = int_to_ptr.vmem [resolvable:$true] %s205
      %s207 = sshll.u32 %s3, 4
      %s208 = int_to_ptr.hbm [resolvable:$true] %s207
      %213 = dma.vmem_to_hbm [thread:$0]  %s206, 512, %s208, [#allocation3], 256, 256, 16
    $region21: #{my_linear.1} parent=1 // pred_fallthru
      _
    // Predicated region
    $region22: #{my_linear.1} parent=1 // pred_check
      _
    $region23: #{my_linear.1} parent=1 // pred_check_branch
      %215 = sbr.rel (0) target = $region25
    $region24: #{my_linear.1} parent=1 // pred_region
      %217 = dma.done [#allocation3], 512
    $region25: #{my_linear.1} parent=1 // pred_fallthru
      _
    %218 = vsyncpa [#allocation3], 1

</llo_original>
